<compile_context>
chip_gen: v7x
topology: tpu7x:2x2x1
jax: 0.10.0
libtpu: 0.0.40
codegen_flags: <defaults>
</compile_context>

<pallas_src>
import functools

import numpy as np

import jax
import jax.numpy as jnp
from jax.experimental import pallas as pl
from jax.experimental.pallas import tpu as pltpu


def _detection_kernel(rowscale_ref, celladd_ref, anch_ref, pred_ref, out_ref):
    """One grid step = one (batch, anchor) pair.

    rowscale_ref : VMEM (1, C5, 1)    per-row multiplicative scale
                                      (stride on rows 0,1; 1 elsewhere)
    celladd_ref  : VMEM (1, C5, GG)   per-row additive constant
                                      (cx*stride row 0, cy*stride row 1, 0 else)
    anch_ref     : VMEM (1, 2, 1)     pixel-space anchor (w, h) for this anchor
    pred_ref     : VMEM (1, 1, C5, GG) raw network prediction block
    out_ref      : VMEM (1, 1, C5, GG) decoded output block
    """
    p = pred_ref[0, 0].astype(jnp.float32)                # (C5, GG)

    # Full slab: rows 0,1 -> (sigmoid+cx/cy)*stride; rows 4.. -> sigmoid.
    # (rows 2,3 written here too, but overwritten just below.)
    out_ref[0, 0] = (jax.nn.sigmoid(p) * rowscale_ref[0]
                     + celladd_ref[0]).astype(out_ref.dtype)

    # w/h rows only: exp(p) * anchor_px.  exp is restricted to 2 of C5 rows;
    # the overwrite is a masked 2-sublane store (cheap).
    p_wh = pred_ref[0, 0, 2:4, :].astype(jnp.float32)      # (2, GG)
    out_ref[0, 0, 2:4, :] = (jnp.exp(p_wh) * anch_ref[0]).astype(out_ref.dtype)


def detection_forward(x, anchors, image_size, num_classes, *,
                      channel_major=False, io_dtype=jnp.float32):
    """Pallas equivalent of Detection.forward()'s `output` (decoded boxes).

    x : (B, A*(num_classes+5), G, G) NCHW conv-head output.
    Returns (B, A*G*G, num_classes+5) when channel_major=False
    (module-compatible), or the transpose-free (B, A, num_classes+5, G*G)
    layout when channel_major=True.
    """
    B, C_in, G, G2 = x.shape
    assert G == G2
    A = len(anchors)
    C5 = num_classes + 5
    assert C_in == A * C5
    GG = G * G
    stride = float(image_size) / float(G)

    # NCHW head output -> (B, A, C5, GG): spatial cells on the lane axis.
    # No lane padding: GG is the full extent of the last dim, so BlockSpecs
    # with last dim GG are legal even when GG % 128 != 0.
    pred = x.reshape(B, A, C5, GG).astype(io_dtype)

    # Host-precomputed constants (exact integer math; removes the in-kernel
    # iota / floor / where chain -> ~2 VALU + 1 EUP op per element).
    idx = np.arange(GG)
    cx = (idx % G).astype(np.float32)
    cy = (idx // G).astype(np.float32)
    celladd = np.zeros((1, C5, GG), np.float32)
    celladd[0, 0, :] = cx * stride
    celladd[0, 1, :] = cy * stride
    rowscale = np.ones((1, C5, 1), np.float32)
    rowscale[0, 0, 0] = stride
    rowscale[0, 1, 0] = stride                 # rows 2,3 are overwritten; rest 1
    anch = np.asarray(anchors, np.float32).reshape(A, 2, 1)   # pixel space

    itemsize = np.dtype(io_dtype).itemsize
    cost = pl.CostEstimate(
        flops=3 * B * A * C5 * GG,
        transcendentals=B * A * (C5 + 2) * GG,
        bytes_accessed=2 * B * A * C5 * GG * itemsize)

    out = pl.pallas_call(
        _detection_kernel,
        out_shape=jax.ShapeDtypeStruct((B, A, C5, GG), io_dtype),
        grid=(B, A),
        in_specs=[
            # Tiny constants; constant block index -> fetched once, VMEM-resident.
            pl.BlockSpec((1, C5, 1), lambda b, a: (0, 0, 0)),
            pl.BlockSpec((1, C5, GG), lambda b, a: (0, 0, 0)),
            pl.BlockSpec((1, 2, 1), lambda b, a: (a, 0, 0)),
            pl.BlockSpec((1, 1, C5, GG), lambda b, a: (b, a, 0, 0)),
        ],
        out_specs=pl.BlockSpec((1, 1, C5, GG), lambda b, a: (b, a, 0, 0)),
        compiler_params=pltpu.CompilerParams(
            dimension_semantics=("parallel", "parallel")),
        cost_estimate=cost,
    )(jnp.asarray(rowscale), jnp.asarray(celladd), jnp.asarray(anch), pred)

    if channel_major:
        return out                              # (B, A, C5, GG) — no extra pass
    # Module-compatible layout.  This transpose is one extra HBM pass; keep
    # the call under jit so it lowers to a single copy, and prefer
    # channel_major=True when the consumer can take feature-major output.
    return out.transpose(0, 1, 3, 2).reshape(B, A * GG, C5)


def detection_reference(x, anchors, image_size, num_classes):
    """Pure-JAX mirror of the PyTorch forward's `output` for verification."""
    B, _, G, _ = x.shape
    A = len(anchors)
    C5 = num_classes + 5
    stride = float(image_size) / float(G)

    pred = x.reshape(B, A, C5, G, G).transpose(0, 1, 3, 4, 2)  # (B,A,G,G,C5)
    tx = jax.nn.sigmoid(pred[..., 0])
    ty = jax.nn.sigmoid(pred[..., 1])
    tw = pred[..., 2]
    th = pred[..., 3]
    conf = jax.nn.sigmoid(pred[..., 4])
    cls = jax.nn.sigmoid(pred[..., 5:])

    g = jnp.arange(G, dtype=jnp.float32)
    cx = g[None, None, None, :]                 # varies along W
    cy = g[None, None, :, None]                 # varies along H
    sa = jnp.asarray(anchors, jnp.float32) / stride
    aw = sa[:, 0].reshape(1, A, 1, 1)
    ah = sa[:, 1].reshape(1, A, 1, 1)

    bbox = jnp.stack([tx + cx, ty + cy, jnp.exp(tw) * aw, jnp.exp(th) * ah],
                     axis=-1)
    bbox = bbox.reshape(B, -1, 4) * stride
    return jnp.concatenate(
        [bbox, conf.reshape(B, -1, 1), cls.reshape(B, -1, num_classes)], -1)


if __name__ == "__main__":
    anchors = ((10.0, 13.0), (16.0, 30.0), (33.0, 23.0))   # 3 anchors
    num_classes = 3                                        # C5 = 8
    A = len(anchors)
    C5 = num_classes + 5
    B = 2

    # Case 1: G=16 (GG=256, lane-aligned), f32 end to end.
    G, image_size = 16, 64
    x = jax.random.normal(jax.random.PRNGKey(0), (B, A * C5, G, G),
                          dtype=jnp.float32)
    fwd = jax.jit(functools.partial(detection_forward, anchors=anchors,
                                    image_size=image_size,
                                    num_classes=num_classes))
    out = jax.block_until_ready(fwd(x))
    ref = detection_reference(x, anchors, image_size, num_classes)
    assert out.shape == (B, A * G * G, C5), out.shape
    assert jnp.allclose(out, ref, atol=1e-4, rtol=1e-5), "mismatch (G=16)"

    # Case 2: G=13 (real-YOLO grid; GG=169 not a multiple of 128 -> exercises
    # the no-pad masked-tail path).
    G2, image_size2 = 13, 416
    x2 = jax.random.normal(jax.random.PRNGKey(1), (B, A * C5, G2, G2),
                           dtype=jnp.float32)
    fwd2 = jax.jit(functools.partial(detection_forward, anchors=anchors,
                                     image_size=image_size2,
                                     num_classes=num_classes))
    out2 = jax.block_until_ready(fwd2(x2))
    ref2 = detection_reference(x2, anchors, image_size2, num_classes)
    assert out2.shape == (B, A * G2 * G2, C5), out2.shape
    assert jnp.allclose(out2, ref2, atol=1e-4, rtol=1e-5), "mismatch (G=13)"

    # Case 3: bfloat16 I/O (half the HBM traffic; f32 compute in-kernel).
    fwd_bf = jax.jit(functools.partial(detection_forward, anchors=anchors,
                                       image_size=image_size2,
                                       num_classes=num_classes,
                                       io_dtype=jnp.bfloat16))
    out_bf = jax.block_until_ready(fwd_bf(x2)).astype(jnp.float32)
    ref_bf = detection_reference(x2.astype(jnp.bfloat16).astype(jnp.float32),
                                 anchors, image_size2, num_classes)
    assert out_bf.shape == (B, A * G2 * G2, C5), out_bf.shape
    assert jnp.allclose(out_bf, ref_bf, atol=5e-2, rtol=5e-2), "mismatch (bf16)"

    print("KERNEL_OK")
</pallas_src>

<mosaic_0001>
module attributes {stable_mosaic.version = 11 : i64} {
  func.func @_detection_kernel(%arg0: i32, %arg1: i32, %arg2: memref<1x8x1xf32, #tpu.memory_space<vmem>>, %arg3: memref<1x8x256xf32, #tpu.memory_space<vmem>>, %arg4: memref<1x2x1xf32, #tpu.memory_space<vmem>>, %arg5: memref<1x1x8x256xf32, #tpu.memory_space<vmem>>, %arg6: memref<1x1x8x256xf32, #tpu.memory_space<vmem>>) attributes {dimension_semantics = [#tpu.dimension_semantics<parallel>, #tpu.dimension_semantics<parallel>], iteration_bounds = array<i64: 2, 3>, scalar_prefetch = 0 : i64, scratch_operands = 0 : i64, tpu.core_type = #tpu.core_type<tc>, window_params = [{pipeline_mode = #tpu.pipeline_mode<synchronous>, transform_indices = @transform_0, window_bounds = array<i64: 1, 8, 1>}, {pipeline_mode = #tpu.pipeline_mode<synchronous>, transform_indices = @transform_1, window_bounds = array<i64: 1, 8, 256>}, {transform_indices = @transform_2, window_bounds = array<i64: 1, 2, 1>}, {transform_indices = @transform_3, window_bounds = array<i64: 1, 1, 8, 256>}, {transform_indices = @transform_4, window_bounds = array<i64: 1, 1, 8, 256>}]} {
    %c0 = arith.constant 0 : index
    %c0_0 = arith.constant 0 : index
    %c0_1 = arith.constant 0 : index
    %c0_2 = arith.constant 0 : index
    %0 = vector.load %arg5[%c0, %c0_0, %c0_1, %c0_2] : memref<1x1x8x256xf32, #tpu.memory_space<vmem>>, vector<1x1x8x256xf32>
    %1 = vector.shape_cast %0 : vector<1x1x8x256xf32> to vector<8x256xf32>
    %2 = arith.negf %1 : vector<8x256xf32>
    %3 = math.exp %2 : vector<8x256xf32>
    %cst = arith.constant 1.000000e+00 : f32
    %4 = vector.broadcast %cst : f32 to vector<8x256xf32>
    %5 = arith.addf %4, %3 : vector<8x256xf32>
    %6 = arith.divf %4, %5 : vector<8x256xf32>
    %c0_3 = arith.constant 0 : index
    %c0_4 = arith.constant 0 : index
    %c0_5 = arith.constant 0 : index
    %7 = vector.load %arg2[%c0_3, %c0_4, %c0_5] : memref<1x8x1xf32, #tpu.memory_space<vmem>>, vector<1x8x1xf32>
    %8 = vector.shape_cast %7 : vector<1x8x1xf32> to vector<8x1xf32>
    %9 = vector.broadcast %8 : vector<8x1xf32> to vector<8x256xf32>
    %10 = arith.mulf %6, %9 : vector<8x256xf32>
    %c0_6 = arith.constant 0 : index
    %c0_7 = arith.constant 0 : index
    %c0_8 = arith.constant 0 : index
    %11 = vector.load %arg3[%c0_6, %c0_7, %c0_8] : memref<1x8x256xf32, #tpu.memory_space<vmem>>, vector<1x8x256xf32>
    %12 = vector.shape_cast %11 : vector<1x8x256xf32> to vector<8x256xf32>
    %13 = arith.addf %10, %12 : vector<8x256xf32>
    %c0_9 = arith.constant 0 : index
    %c0_10 = arith.constant 0 : index
    %c0_11 = arith.constant 0 : index
    %c0_12 = arith.constant 0 : index
    %14 = vector.load %arg6[%c0_9, %c0_10, %c0_11, %c0_12] : memref<1x1x8x256xf32, #tpu.memory_space<vmem>>, vector<1x1x8x256xf32>
    %15 = vector.shape_cast %14 : vector<1x1x8x256xf32> to vector<8x256xf32>
    %16 = vector.shape_cast %13 : vector<8x256xf32> to vector<1x1x8x256xf32>
    tpu.vector_store %arg6[%c0_9, %c0_10, %c0_11, %c0_12], %16 {strides = array<i32>} : memref<1x1x8x256xf32, #tpu.memory_space<vmem>>, vector<1x1x8x256xf32>,
    %c0_13 = arith.constant 0 : index
    %c0_14 = arith.constant 0 : index
    %c2 = arith.constant 2 : index
    %c0_15 = arith.constant 0 : index
    %17 = vector.load %arg5[%c0_13, %c0_14, %c2, %c0_15] : memref<1x1x8x256xf32, #tpu.memory_space<vmem>>, vector<1x1x2x256xf32>
    %18 = vector.shape_cast %17 : vector<1x1x2x256xf32> to vector<2x256xf32>
    %19 = math.exp %18 : vector<2x256xf32>
    %c0_16 = arith.constant 0 : index
    %c0_17 = arith.constant 0 : index
    %c0_18 = arith.constant 0 : index
    %20 = vector.load %arg4[%c0_16, %c0_17, %c0_18] : memref<1x2x1xf32, #tpu.memory_space<vmem>>, vector<1x2x1xf32>
    %21 = vector.shape_cast %20 : vector<1x2x1xf32> to vector<2x1xf32>
    %22 = vector.broadcast %21 : vector<2x1xf32> to vector<2x256xf32>
    %23 = arith.mulf %19, %22 : vector<2x256xf32>
    %c0_19 = arith.constant 0 : index
    %c0_20 = arith.constant 0 : index
    %c2_21 = arith.constant 2 : index
    %c0_22 = arith.constant 0 : index
    %24 = vector.load %arg6[%c0_19, %c0_20, %c2_21, %c0_22] : memref<1x1x8x256xf32, #tpu.memory_space<vmem>>, vector<1x1x2x256xf32>
    %25 = vector.shape_cast %24 : vector<1x1x2x256xf32> to vector<2x256xf32>
    %26 = vector.shape_cast %23 : vector<2x256xf32> to vector<1x1x2x256xf32>
    tpu.vector_store %arg6[%c0_19, %c0_20, %c2_21, %c0_22], %26 {strides = array<i32>} : memref<1x1x8x256xf32, #tpu.memory_space<vmem>>, vector<1x1x2x256xf32>,
    return
  }
  func.func @transform_0(%arg0: i32, %arg1: i32) -> (i32, i32, i32) {
    %c0_i32 = arith.constant 0 : i32
    %c0_i32_0 = arith.constant 0 : i32
    %c0_i32_1 = arith.constant 0 : i32
    %c0_i32_2 = arith.constant 0 : i32
    return %c0_i32, %c0_i32_0, %c0_i32_1 : i32, i32, i32
  }
  func.func @transform_1(%arg0: i32, %arg1: i32) -> (i32, i32, i32) {
    %c0_i32 = arith.constant 0 : i32
    %c0_i32_0 = arith.constant 0 : i32
    %c0_i32_1 = arith.constant 0 : i32
    %c0_i32_2 = arith.constant 0 : i32
    return %c0_i32, %c0_i32_0, %c0_i32_1 : i32, i32, i32
  }
  func.func @transform_2(%arg0: i32, %arg1: i32) -> (i32, i32, i32) {
    %c0_i32 = arith.constant 0 : i32
    %c0_i32_0 = arith.constant 0 : i32
    %c0_i32_1 = arith.constant 0 : i32
    return %arg1, %c0_i32, %c0_i32_0 : i32, i32, i32
  }
  func.func @transform_3(%arg0: i32, %arg1: i32) -> (i32, i32, i32, i32) {
    %c0_i32 = arith.constant 0 : i32
    %c0_i32_0 = arith.constant 0 : i32
    %c0_i32_1 = arith.constant 0 : i32
    return %arg0, %arg1, %c0_i32, %c0_i32_0 : i32, i32, i32, i32
  }
  func.func @transform_4(%arg0: i32, %arg1: i32) -> (i32, i32, i32, i32) {
    %c0_i32 = arith.constant 0 : i32
    %c0_i32_0 = arith.constant 0 : i32
    %c0_i32_1 = arith.constant 0 : i32
    return %arg0, %arg1, %c0_i32, %c0_i32_0 : i32, i32, i32, i32
  }
}

</mosaic_0001>

<llo_original>
// kernel: detection_forward.1
$region0: #{detection_forward.1}
  #allocation0 [shape = 'u32[]', space=smem, size = 0x4, offset = 0x4, fixed_abs, tag = 'smem constant byte address 0x4 - core index']
  #allocation1 [shape = 'u32[144,128]{1,0:T(1,128)}', space=vmem, size = 0x12000, scoped, tag = 'internal scratch']
  %s0 = inlined_call_operand.vmem [shape: f32[1,8,1], index: 0, kind: input, shape index: {}]
  %s1 = inlined_call_operand.vmem [shape: f32[1,8,256], index: 1, kind: input, shape index: {}]
  %s2 = inlined_call_operand.vmem [shape: f32[3,2,1], index: 2, kind: input, shape index: {}]
  %s3 = inlined_call_operand.vmem [shape: f32[2,3,8,256], index: 3, kind: input, shape index: {}]
  %s4 = inlined_call_operand.hbm [shape: f32[2,3,8,256], index: 4, kind: output, shape index: {}]
  %s5 = sld [smem:[#allocation0]]
  $region49: #{detection_forward.1} parent=0
    _
  %s7 = ssub.s32 1, %s5
  %s8 = scalar_select 0, %s7, %s5
  $region1: #{detection_forward.1} parent=0
    #allocation2 [shape = 'u8[16384]{0}', space=vmem, size = 0x4000, scoped, tag = 'output window, operand 0']
    #allocation3 [shape = 's32[2]{0}', space=sflag, size = 0x8, scoped, tag = 'scoped memory for detection_forward.1']
    %9 = vsyncpa [#allocation3], 0
    %s10 = scalar_lea.sflag [#allocation3], 1
    %11 = vsyncpa %s10, 0
    loop: start=0, step=1, limit=8
    $region2: #{detection_forward.1} parent=1 // loop_pre_header
      _
    $region3: #{detection_forward.1} parent=1 // loop_header
      %s13 = sphi 0, %s17
      %p14 = scmp.ge.s32.totalorder %s13, 8
      %s20 = sphi 0, %s32
      %s21 = sphi 0, %s28
      %s22 = sphi 0, %s20
      %s23 = sphi 0, %s21
      %s24 = sphi 0, %s22
      %s25 = sphi 0, %s23
      %s33 = sphi 0, %s33
      %s35 = sphi 0, %s33
      %s36 = sphi 0, %s35
      %s50 = sphi 0, %s36
      %s54 = sphi 0, %s54
      %s56 = sphi 0, %s54
      %s57 = sphi 0, %s56
      %s71 = sphi 0, %s57
      %s77 = sphi 0, %s79
      %s80 = sphi 0, %s77
      %s81 = sphi 0, %s80
      %s97 = sphi 0, %s81
      %s105 = sphi 0, %s107
      %s108 = sphi 0, %s105
      %s109 = sphi 0, %s108
      %s125 = sphi 0, %s109
      %s133 = sphi 0, %s135
      %s136 = sphi 0, %s133
      %s137 = sphi 0, %s136
      %s153 = sphi 0, %s137
    $region4: #{detection_forward.1} parent=1 // loop_header_branch
      %16 = sbr.rel (%p14) target = $region8
    $region5: #{detection_forward.1} parent=1 // loop_body
      %s18 = ssub.s32 %s13, 1
      %s19 = ssub.s32 %s13, 2
      %s26 = sadd.s32 1, %s21
      %p27 = scmp.ge.s32.totalorder %s26, 3
      %s28 = scalar_select %p27, 0, %s26
      %s29 = sadd.s32 1, %s20
      %s30 = scalar_select %p27, %s29, %s20
      %p31 = scmp.ge.s32.totalorder %s30, 2
      %s32 = scalar_select %p31, 0, %s30
      %s34 = sadd.s32 %s33, 1
      %p37 = scmp.eq.s32.totalorder %s13, 5
      %p38 = scmp.ne.s32.totalorder %s33, %s35
      %p39 = scmp.eq.s32.totalorder %s13, 0
      %p40 = por %p38, %p39
      %p41 = scmp.ne.s32.totalorder %s33, %s35
      %p42 = scmp.eq.s32.totalorder %s18, 5
      %p43 = por %p41, %p42
      %p44 = scmp.ne.s32.totalorder %s35, %s36
      %p45 = scmp.eq.s32.totalorder %s18, 0
      %p46 = por %p44, %p45
      %p47 = scmp.ne.s32.totalorder %s35, %s36
      %p48 = scmp.eq.s32.totalorder %s19, 5
      %p49 = por %p47, %p48
      %p51 = scmp.ne.s32.totalorder %s36, %s50
      %p52 = scmp.eq.s32.totalorder %s19, 0
      %p53 = por %p51, %p52
      %s55 = sadd.s32 %s54, 1
      %p58 = scmp.eq.s32.totalorder %s13, 5
      %p59 = scmp.ne.s32.totalorder %s54, %s56
      %p60 = scmp.eq.s32.totalorder %s13, 0
      %p61 = por %p59, %p60
      %p62 = scmp.ne.s32.totalorder %s54, %s56
      %p63 = scmp.eq.s32.totalorder %s18, 5
      %p64 = por %p62, %p63
      %p65 = scmp.ne.s32.totalorder %s56, %s57
      %p66 = scmp.eq.s32.totalorder %s18, 0
      %p67 = por %p65, %p66
      %p68 = scmp.ne.s32.totalorder %s56, %s57
      %p69 = scmp.eq.s32.totalorder %s19, 5
      %p70 = por %p68, %p69
      %p72 = scmp.ne.s32.totalorder %s57, %s71
      %p73 = scmp.eq.s32.totalorder %s19, 0
      %p74 = por %p72, %p73
      %s75 = ssub.s32 %s21, %s28
      %p76 = scmp.eq.s32.totalorder %s75, 0
      %s78 = sadd.s32 %s77, 1
      %s79 = scalar_select %p76, %s77, %s78
      %p82 = pneg %p76
      %p83 = scmp.eq.s32.totalorder %s13, 5
      %p84 = por %p82, %p83
      %p85 = scmp.ne.s32.totalorder %s77, %s80
      %p86 = scmp.eq.s32.totalorder %s13, 0
      %p87 = por %p85, %p86
      %p88 = scmp.ne.s32.totalorder %s77, %s80
      %p89 = scmp.eq.s32.totalorder %s18, 5
      %p90 = por %p88, %p89
      %p91 = scmp.ne.s32.totalorder %s80, %s81
      %p92 = scmp.eq.s32.totalorder %s18, 0
      %p93 = por %p91, %p92
      %p94 = scmp.ne.s32.totalorder %s80, %s81
      %p95 = scmp.eq.s32.totalorder %s19, 5
      %p96 = por %p94, %p95
      %p98 = scmp.ne.s32.totalorder %s81, %s97
      %p99 = scmp.eq.s32.totalorder %s19, 0
      %p100 = por %p98, %p99
      %s101 = ssub.s32 %s20, %s32
      %s102 = ssub.s32 %s21, %s28
      %s103 = sor.u32 %s101, %s102
      %p104 = scmp.eq.s32.totalorder %s103, 0
      %s106 = sadd.s32 %s105, 1
      %s107 = scalar_select %p104, %s105, %s106
      %p110 = pneg %p104
      %p111 = scmp.eq.s32.totalorder %s13, 5
      %p112 = por %p110, %p111
      %p113 = scmp.ne.s32.totalorder %s105, %s108
      %p114 = scmp.eq.s32.totalorder %s13, 0
      %p115 = por %p113, %p114
      %p116 = scmp.ne.s32.totalorder %s105, %s108
      %p117 = scmp.eq.s32.totalorder %s18, 5
      %p118 = por %p116, %p117
      %p119 = scmp.ne.s32.totalorder %s108, %s109
      %p120 = scmp.eq.s32.totalorder %s18, 0
      %p121 = por %p119, %p120
      %p122 = scmp.ne.s32.totalorder %s108, %s109
      %p123 = scmp.eq.s32.totalorder %s19, 5
      %p124 = por %p122, %p123
      %p126 = scmp.ne.s32.totalorder %s109, %s125
      %p127 = scmp.eq.s32.totalorder %s19, 0
      %p128 = por %p126, %p127
      %s129 = ssub.s32 %s20, %s32
      %s130 = ssub.s32 %s21, %s28
      %s131 = sor.u32 %s129, %s130
      %p132 = scmp.eq.s32.totalorder %s131, 0
      %s134 = sadd.s32 %s133, 1
      %s135 = scalar_select %p132, %s133, %s134
      %p138 = pneg %p132
      %p139 = scmp.eq.s32.totalorder %s13, 5
      %p140 = por %p138, %p139
      %p141 = scmp.ne.s32.totalorder %s133, %s136
      %p142 = scmp.eq.s32.totalorder %s13, 0
      %p143 = por %p141, %p142
      %p144 = scmp.ne.s32.totalorder %s133, %s136
      %p145 = scmp.eq.s32.totalorder %s18, 5
      %p146 = por %p144, %p145
      %p147 = scmp.ne.s32.totalorder %s136, %s137
      %p148 = scmp.eq.s32.totalorder %s18, 0
      %p149 = por %p147, %p148
      %p150 = scmp.ne.s32.totalorder %s136, %s137
      %p151 = scmp.eq.s32.totalorder %s19, 5
      %p152 = por %p150, %p151
      %p154 = scmp.ne.s32.totalorder %s137, %s153
      %p155 = scmp.eq.s32.totalorder %s19, 0
      %p156 = por %p154, %p155
      %p157 = scmp.le.s32.totalorder 1, %s13
      %p158 = scmp.lt.s32.totalorder %s13, 7
      %p159 = pnand %p157, %p158
      %p160 = pneg %p159
      // Predicated region
      $region9: #{detection_forward.1} parent=5 // pred_check
        _
      $region10: #{detection_forward.1} parent=5 // pred_check_branch
        %162 = sbr.rel (%p159) target = $region12
      $region11: #{detection_forward.1} parent=5 // pred_region
        %s163 = ssub.s32 %s13, 1
        // Predicated region
        $region13: #{detection_forward.1} parent=11 // pred_check
          %p164 = pneg %p46
        $region14: #{detection_forward.1} parent=11 // pred_check_branch
          %166 = sbr.rel (%p164) target = $region16
        $region15: #{detection_forward.1} parent=11 // pred_region
          _
        $region16: #{detection_forward.1} parent=11 // pred_fallthru
          _
        // Predicated region
        $region17: #{detection_forward.1} parent=11 // pred_check
          %p167 = pneg %p67
        $region18: #{detection_forward.1} parent=11 // pred_check_branch
          %169 = sbr.rel (%p167) target = $region20
        $region19: #{detection_forward.1} parent=11 // pred_region
          _
        $region20: #{detection_forward.1} parent=11 // pred_fallthru
          _
      $region12: #{detection_forward.1} parent=5 // pred_fallthru
        _
      %p170 = scmp.lt.s32.totalorder %s13, 6
      // Predicated region
      $region21: #{detection_forward.1} parent=5 // pred_check
        %p171 = pneg %p170
      $region22: #{detection_forward.1} parent=5 // pred_check_branch
        %173 = sbr.rel (%p171) target = $region24
      $region23: #{detection_forward.1} parent=5 // pred_region
        // Predicated region
        $region25: #{detection_forward.1} parent=23 // pred_check
          %p174 = pneg %p87
        $region26: #{detection_forward.1} parent=23 // pred_check_branch
          %176 = sbr.rel (%p174) target = $region28
        $region27: #{detection_forward.1} parent=23 // pred_region
          %p177 = scmp.lt.s32.totalorder %s21, 2
          %s178 = scalar_select %p177, %s21, 2
          %s179 = smul.addr %s178, 2
          %s180 = scalar_lea.vmem %s2, %s179
        $region28: #{detection_forward.1} parent=23 // pred_fallthru
          _
        // Predicated region
        $region29: #{detection_forward.1} parent=23 // pred_check
          %p181 = pneg %p115
        $region30: #{detection_forward.1} parent=23 // pred_check_branch
          %183 = sbr.rel (%p181) target = $region32
        $region31: #{detection_forward.1} parent=23 // pred_region
          %p184 = scmp.lt.s32.totalorder %s20, 1
          %s185 = scalar_select %p184, %s20, 1
          %p186 = scmp.lt.s32.totalorder %s21, 2
          %s187 = scalar_select %p186, %s21, 2
          %s188 = smul.addr %s187, 2
          %s189 = smul.addr %s185, 6
          %s190 = sadd.s32 %s188, %s189
          %s191 = smul.addr %s190, 8
          %s192 = scalar_lea.vmem %s3, %s191
        $region32: #{detection_forward.1} parent=23 // pred_fallthru
          _
      $region24: #{detection_forward.1} parent=5 // pred_fallthru
        _
      %p193 = scmp.le.s32.totalorder 1, %s13
      %p194 = scmp.lt.s32.totalorder %s13, 7
      %p195 = pnand %p193, %p194
      %p196 = pneg %p195
      // Predicated region
      $region33: #{detection_forward.1} parent=5 // pred_check
        _
      $region34: #{detection_forward.1} parent=5 // pred_check_branch
        %198 = sbr.rel (%p195) target = $region36
      $region35: #{detection_forward.1} parent=5 // pred_region
        %s199 = ssub.s32 %s13, 1
        %p200 = pneg %p46
        %p201 = pneg %p43
        %p202 = pneg %p67
        %p203 = pneg %p64
        %p204 = scmp.lt.s32.totalorder %s23, 2
        %s205 = scalar_select %p204, %s23, 2
        %s206 = smul.addr %s205, 2
        %s207 = scalar_lea.vmem %s2, %s206
        %p208 = pneg %p93
        %p209 = pneg %p90
        %p210 = scmp.lt.s32.totalorder %s22, 1
        %s211 = scalar_select %p210, %s22, 1
        %p212 = scmp.lt.s32.totalorder %s23, 2
        %s213 = scalar_select %p212, %s23, 2
        %s214 = smul.addr %s213, 2
        %s215 = smul.addr %s211, 6
        %s216 = sadd.s32 %s214, %s215
        %s217 = smul.addr %s216, 8
        %s218 = scalar_lea.vmem %s3, %s217
        %p219 = pneg %p121
        %p220 = pneg %p118
        %p221 = pneg %p149
        %p222 = pneg %p146
        %s223 = sand.u32 %s136, 1
        %s224 = scalar_lea.sflag [#allocation3], %s223
        %s225 = sand.u32 %s136, 1
        %s226 = smul.addr %s225, 16
        %s227 = scalar_lea.vmem [#allocation2], %s226
        %p228 = scmp.lt.s32.totalorder %s23, 2
        %s229 = scalar_select %p228, %s23, 2
        %s230 = smul.addr %s229, 2
        %s231 = scalar_lea.vmem %s2, %s230
        %p232 = scmp.lt.s32.totalorder %s22, 1
        %s233 = scalar_select %p232, %s22, 1
        %p234 = scmp.lt.s32.totalorder %s23, 2
        %s235 = scalar_select %p234, %s23, 2
        %s236 = smul.addr %s235, 2
        %s237 = smul.addr %s233, 6
        %s238 = sadd.s32 %s236, %s237
        %s239 = smul.addr %s238, 8
        %s240 = scalar_lea.vmem %s3, %s239
        %v241 = vld [vmem:[%s240] sm:$0xff]
        %v242 = vld [vmem:[%s240 + $0x8] sm:$0xff]
        %v243 = vxor.u32 %v241, 2147483648
        %v244 = vxor.u32 %v242, 2147483648
        %v245 = vmul.f32 %v243, 1.442695
        %v246 = vpow.pop %v245
        %v247 = vmul.f32 %v244, 1.442695
        %v248 = vpow.pop %v247
        %v249 = vadd.f32 %v246, 1.0
        %v250 = vadd.f32 %v248, 1.0
        %v251 = vrcp.pop %v249
        %v252 = vmul.f32 1.0, %v251
        %v253 = vrcp.pop %v250
        %v254 = vmul.f32 1.0, %v253
        %v255 = vld [vmem:[%s0] sm:$0xff]
        %257 = vset.pattern.permute.xlu0 0
        %258 = vperm.xlu0 %257, %v255
        %v259 = vpop.permute.xlu0 %258
        %v261 = vmul.f32 %v252, %v259
        %v262 = vmul.f32 %v254, %v259
        %v263 = vld [vmem:[%s1] sm:$0xff]
        %v264 = vld [vmem:[%s1 + $0x8] sm:$0xff]
        %v265 = vadd.f32 %v261, %v263
        %v266 = vadd.f32 %v262, %v264
        %267 = vst [vmem:[%s227] sm:$0xff] %v265
        %268 = vst [vmem:[%s227 + $0x8] sm:$0xff] %v266
        %v269 = vld [vmem:[%s240] sm:$0xc]
        %v270 = vld [vmem:[%s240 + $0x8] sm:$0xc]
        %v271 = vmul.f32 %v269, 1.442695
        %v272 = vpow.pop %v271
        %v273 = vmul.f32 %v270, 1.442695
        %v274 = vpow.pop %v273
        %v275 = vld [vmem:[%s231] sm:$0x3]
        %277 = vset.pattern.permute.xlu0 0
        %278 = vperm.xlu0 %277, %v275
        %v279 = vpop.permute.xlu0 %278
        %v280 = vrot.slane %v279, 6
        %v282 = vmul.f32 %v272, %v280
        %v283 = vmul.f32 %v274, %v280
        %284 = vst [vmem:[%s227] sm:$0xc] %v282
        %285 = vst [vmem:[%s227 + $0x8] sm:$0xc] %v283
        %s286 = sand.u32 %s136, 1
        %s287 = scalar_lea.sflag [#allocation3], %s286
        %s288 = sand.u32 %s136, 1
        %s289 = smul.addr %s288, 16
        %s290 = scalar_lea.vmem [#allocation2], %s289
        // Predicated region
        $region37: #{detection_forward.1} parent=35 // pred_check
          %p291 = pneg %p146
        $region38: #{detection_forward.1} parent=35 // pred_check_branch
          %293 = sbr.rel (%p291) target = $region40
        $region39: #{detection_forward.1} parent=35 // pred_region
          %s295 = ssub.s32 256, 256
          %296 = vsyncadd %s287, %s295
          %s297 = smul.addr %s23, 2
          %s298 = smul.addr %s22, 6
          %s299 = sadd.s32 %s297, %s298
          %s300 = smul.addr %s299, 128
          %s301 = scalar_lea.hbm %s4, %s300
          %s303 = sshll.u32 %s290, 4
          %s304 = int_to_ptr.vmem [resolvable:$true] %s303
          %306 = dma.vmem_to_hbm [thread:$0]  %s304, 256, %s301, %s287
        $region40: #{detection_forward.1} parent=35 // pred_fallthru
          _
      $region36: #{detection_forward.1} parent=5 // pred_fallthru
        _
      %p307 = scmp.le.s32.totalorder 2, %s13
      // Predicated region
      $region41: #{detection_forward.1} parent=5 // pred_check
        %p308 = pneg %p307
      $region42: #{detection_forward.1} parent=5 // pred_check_branch
        %310 = sbr.rel (%p308) target = $region44
      $region43: #{detection_forward.1} parent=5 // pred_region
        %s311 = ssub.s32 %s13, 2
        // Predicated region
        $region45: #{detection_forward.1} parent=43 // pred_check
          %p312 = pneg %p152
        $region46: #{detection_forward.1} parent=43 // pred_check_branch
          %314 = sbr.rel (%p312) target = $region48
        $region47: #{detection_forward.1} parent=43 // pred_region
          %s315 = sand.u32 %s137, 1
          %s316 = scalar_lea.sflag [#allocation3], %s315
          %s317 = sand.u32 %s137, 1
          %s318 = smul.addr %s317, 16
          %s319 = scalar_lea.vmem [#allocation2], %s318
          %320 = dma.done %s316, 256
        $region48: #{detection_forward.1} parent=43 // pred_fallthru
          _
      $region44: #{detection_forward.1} parent=5 // pred_fallthru
        _
    $region6: #{detection_forward.1} parent=1 // loop_footer
      %s17 = sadd.s32 1, %s13
    $region7: #{detection_forward.1} parent=1 // loop_footer_branch
      %12 = sbr.rel target = $region3
    $region8: #{detection_forward.1} parent=1 // loop_exit
      _
    %321 = vsyncpa [#allocation3], 1
    %s322 = scalar_lea.sflag [#allocation3], 1
    %323 = vsyncpa %s322, 1

</llo_original>
